<compile_context>
chip_gen: v5e
topology: v5e:2x2
jax: 0.10.0
libtpu: 0.0.40
codegen_flags: <defaults>
</compile_context>

<pallas_src>
import jax
import jax.numpy as jnp
from jax.experimental import pallas as pl
from jax.experimental.pallas import tpu as pltpu

MIB = 1024 * 1024


def _mlp_kernel(x_ref, w1_ref, b1_ref, w2_ref, b2_ref, o_ref, acc_ref):
    """One (row-tile i, d_mlp-tile k) grid step.

    x_ref  : (bm, d_model)          input rows (any float dtype; cast in VMEM)
    w1_ref : (d_model, bk)          read_in weight slab,  already transposed (in, out)
    b1_ref : (1, bk)      f32       read_in bias slab
    w2_ref : (bk, d_model)          write_out weight slab, already transposed (in, out)
    b2_ref : (1, d_model) f32       write_out bias
    o_ref  : (bm, d_model)          output rows
    acc_ref: (bm, d_model) f32      accumulator over the d_mlp reduction axis
    """
    k = pl.program_id(1)

    x = x_ref[...].astype(w1_ref.dtype)
    # preacts = x @ W1.T  (W1 pre-transposed -> canonical NN contraction on MXU)
    pre = jnp.dot(x, w1_ref[...], preferred_element_type=jnp.float32) + b1_ref[...]
    acts = jnp.maximum(pre, 0.0).astype(w2_ref.dtype)       # ReLU in f32, back to matmul dtype
    # partial = acts @ W2.T  (W2 pre-transposed)
    partial = jnp.dot(acts, w2_ref[...], preferred_element_type=jnp.float32)

    @pl.when(k == 0)
    def _():
        acc_ref[...] = partial          # first slab: write directly, no zero-init pass

    @pl.when(k > 0)
    def _():
        acc_ref[...] += partial

    @pl.when(k == pl.num_programs(1) - 1)
    def _():
        o_ref[...] = (acc_ref[...] + b2_ref[...]).astype(o_ref.dtype)


def _round_up(x, m):
    return -(-x // m) * m


def _vmem_capacity_bytes():
    """Physical VMEM per TensorCore; conservative 64 MiB (v7x) fallback."""
    try:
        info = pltpu.get_tpu_info()
        cap = getattr(info, "vmem_capacity_bytes", None)
        if cap:
            return int(cap)
    except Exception:
        pass
    return 64 * MIB


def _vmem_need(block_rows, block_dmlp, d_model, w_isz, x_isz, o_isz):
    """Double-buffered tile working set + resident accumulator."""
    x_t = 2 * block_rows * d_model * x_isz
    w1_t = 2 * d_model * block_dmlp * w_isz
    w2_t = 2 * block_dmlp * d_model * w_isz
    b1_t = 2 * block_dmlp * 4
    b2_t = 2 * d_model * 4
    out_t = 2 * block_rows * d_model * o_isz
    acc = block_rows * d_model * 4
    return x_t + w1_t + w2_t + b1_t + b2_t + out_t + acc


def _pick_block_dmlp(d_mlp, target):
    """Largest multiple of 128 that divides d_mlp and is <= target; else full d_mlp."""
    best = d_mlp  # full extent is always layout-legal
    c = 128
    while c <= min(d_mlp, target):
        if d_mlp % c == 0:
            best = c
        c += 128
    return best


def _derive_tiles(n, d_model, d_mlp, x_isz, w_isz, o_isz, vmem_budget,
                  block_rows=None, block_dmlp=None):
    row_align = 16 if min(x_isz, o_isz) <= 2 else 8
    big_vmem = vmem_budget >= 80 * MIB          # v5e / v6e (128 MiB physical)

    if block_dmlp is None:
        block_dmlp = _pick_block_dmlp(d_mlp, 1024 if big_vmem else 512)
    if block_rows is None:
        target = 768 if big_vmem else 384        # toward weight-streaming crossover
        block_rows = min(target, _round_up(n, row_align))
        if block_rows >= 256:
            block_rows = (block_rows // 256) * 256   # MXU 256-alignment (v6e/v7x)
    block_rows = max(row_align, _round_up(block_rows, row_align))

    # Keep >=2 row tiles for megacore / dual-TC sharding when the batch allows it.
    if n > 512 and _round_up(n, block_rows) // block_rows < 2:
        block_rows = max(256, _round_up(block_rows // 2, row_align))

    # Shrink to fit the VMEM budget.
    for _ in range(16):
        if _vmem_need(block_rows, block_dmlp, d_model, w_isz, x_isz, o_isz) <= vmem_budget:
            break
        if block_rows > row_align:
            block_rows = max(row_align, _round_up(block_rows // 2, row_align))
            continue
        smaller = _pick_block_dmlp(d_mlp, max(128, block_dmlp // 2))
        if smaller < block_dmlp:
            block_dmlp = smaller
            continue
        break
    return block_rows, block_dmlp


def prepare_mlp_params(w1, b1, w2, b2, *, compute_dtype=jnp.bfloat16):
    """One-time weight prep (call at weight-load time, NOT per forward).

    Transposes the PyTorch (out_features, in_features) weights to the canonical
    (in_features, out_features) matmul layout and casts them to the matmul
    compute dtype (default bf16). Biases stay in f32.
    """
    w1t = jnp.asarray(w1).T.astype(compute_dtype)            # (d_model, d_mlp)
    w2t = jnp.asarray(w2).T.astype(compute_dtype)            # (d_mlp, d_model)
    b1_2d = jnp.asarray(b1).reshape(1, -1).astype(jnp.float32)
    b2_2d = jnp.asarray(b2).reshape(1, -1).astype(jnp.float32)
    return w1t, b1_2d, w2t, b2_2d


def mlp_forward(x, w1t, b1_2d, w2t, b2_2d, *, block_rows=None, block_dmlp=None):
    """Pallas MLP forward over the last dim of x, using prepared params."""
    orig_shape = x.shape
    out_dtype = x.dtype
    d_model = orig_shape[-1]
    d_model_w, d_mlp = w1t.shape
    assert d_model_w == d_model and w2t.shape == (d_mlp, d_model)
    assert b1_2d.shape == (1, d_mlp) and b2_2d.shape == (1, d_model)

    xf = x.reshape(-1, d_model)
    n = xf.shape[0]

    x_isz = jnp.dtype(xf.dtype).itemsize
    w_isz = jnp.dtype(w1t.dtype).itemsize
    o_isz = jnp.dtype(out_dtype).itemsize

    vmem_cap = _vmem_capacity_bytes()
    vmem_budget = min(int(vmem_cap * 0.75), 100 * MIB)

    block_rows, block_dmlp = _derive_tiles(
        n, d_model, d_mlp, x_isz, w_isz, o_isz, vmem_budget, block_rows, block_dmlp)

    # Lowering-robustness checks (lane rule for b1/w1 slabs, reduction coverage).
    assert d_mlp % block_dmlp == 0, "block_dmlp must divide d_mlp"
    assert block_dmlp == d_mlp or block_dmlp % 128 == 0, \
        "block_dmlp must be a multiple of 128 (or the full d_mlp)"

    n_pad = _round_up(n, block_rows)
    if n_pad != n:
        xf = jnp.pad(xf, ((0, n_pad - n), (0, 0)))

    num_row_tiles = n_pad // block_rows
    grid = (num_row_tiles, d_mlp // block_dmlp)

    need = _vmem_need(block_rows, block_dmlp, d_model, w_isz, x_isz, o_isz)
    vmem_limit = int(min(vmem_cap - 2 * MIB,
                         max(int(need * 1.25) + 2 * MIB, 32 * MIB)))

    flops = 4 * n_pad * d_model * d_mlp           # two matmuls, 2*M*K*N each
    # Weights (and bias slabs) are re-streamed once per row tile.
    bytes_accessed = int(
        n_pad * d_model * (x_isz + o_isz)
        + num_row_tiles * ((w1t.size + w2t.size) * w_isz
                           + (b1_2d.size + b2_2d.size) * 4))

    out = pl.pallas_call(
        _mlp_kernel,
        out_shape=jax.ShapeDtypeStruct((n_pad, d_model), out_dtype),
        grid_spec=pltpu.PrefetchScalarGridSpec(
            num_scalar_prefetch=0,
            grid=grid,
            in_specs=[
                pl.BlockSpec((block_rows, d_model), lambda i, k: (i, 0)),   # x rows
                pl.BlockSpec((d_model, block_dmlp), lambda i, k: (0, k)),   # W1^T slab
                pl.BlockSpec((1, block_dmlp), lambda i, k: (0, k)),         # b1 slab
                pl.BlockSpec((block_dmlp, d_model), lambda i, k: (k, 0)),   # W2^T slab
                pl.BlockSpec((1, d_model), lambda i, k: (0, 0)),            # b2
            ],
            out_specs=pl.BlockSpec((block_rows, d_model), lambda i, k: (i, 0)),
            scratch_shapes=[pltpu.VMEM((block_rows, d_model), jnp.float32)],
        ),
        compiler_params=pltpu.CompilerParams(
            dimension_semantics=("parallel", "arbitrary"),
            vmem_limit_bytes=vmem_limit,
        ),
        cost_estimate=pl.CostEstimate(
            flops=flops, transcendentals=0, bytes_accessed=bytes_accessed),
    )(xf, w1t, b1_2d, w2t, b2_2d)

    return out[:n].reshape(orig_shape[:-1] + (d_model,)).astype(out_dtype)


def mlp_reference(x, w1, b1, w2, b2):
    """Pure-JAX reference mirroring the PyTorch MLP forward (f32)."""
    h = jnp.maximum(x @ w1.T + b1, 0.0)
    return h @ w2.T + b2


if __name__ == "__main__":
    # Small but lane-dense shapes: batch=2, seq=8, d_model=128, d_mlp=512.
    B, S = 2, 8
    d_model, d_mlp = 128, 512

    key = jax.random.PRNGKey(0)
    kx, k1, kb1, k2, kb2 = jax.random.split(key, 5)
    x = jax.random.normal(kx, (B, S, d_model), jnp.float32)
    w1 = 0.1 * jax.random.normal(k1, (d_mlp, d_model), jnp.float32)    # read_in.weight
    b1 = 0.05 * jax.random.normal(kb1, (d_mlp,), jnp.float32)          # read_in.bias
    w2 = 0.1 * jax.random.normal(k2, (d_model, d_mlp), jnp.float32)    # write_out.weight
    b2 = 0.05 * jax.random.normal(kb2, (d_model,), jnp.float32)        # write_out.bias

    ref = mlp_reference(x, w1, b1, w2, b2)

    # f32-weight path with explicit small tiles: exercises the row-parallel axis
    # and the d_mlp reduction axis (grid = (2, 4)); tight tolerance.
    params_f32 = prepare_mlp_params(w1, b1, w2, b2, compute_dtype=jnp.float32)
    out_f32 = jax.block_until_ready(
        mlp_forward(x, *params_f32, block_rows=8, block_dmlp=128))
    assert out_f32.shape == x.shape
    assert jnp.allclose(out_f32, ref, atol=1e-4, rtol=1e-4), \
        float(jnp.max(jnp.abs(out_f32 - ref)))

    # Default path: bf16 matmuls, f32 accumulation, auto-derived tiles / VMEM limit.
    params = prepare_mlp_params(w1, b1, w2, b2)          # bf16 weights, prepared once
    out_bf16 = jax.block_until_ready(mlp_forward(x, *params))
    assert out_bf16.shape == x.shape
    assert jnp.allclose(out_bf16, ref, atol=2.5e-1, rtol=5e-2), \
        float(jnp.max(jnp.abs(out_bf16 - ref)))

    print("KERNEL_OK")
</pallas_src>

<mosaic_0001>
module attributes {stable_mosaic.version = 11 : i64} {
  func.func @_mlp_kernel(%arg0: i32, %arg1: i32, %arg2: memref<8x128xf32, #tpu.memory_space<vmem>>, %arg3: memref<128x128xf32, #tpu.memory_space<vmem>>, %arg4: memref<1x128xf32, #tpu.memory_space<vmem>>, %arg5: memref<128x128xf32, #tpu.memory_space<vmem>>, %arg6: memref<1x128xf32, #tpu.memory_space<vmem>>, %arg7: memref<8x128xf32, #tpu.memory_space<vmem>>, %arg8: memref<8x128xf32, #tpu.memory_space<vmem>>) attributes {dimension_semantics = [#tpu.dimension_semantics<parallel>, #tpu.dimension_semantics<arbitrary>], iteration_bounds = array<i64: 2, 4>, scalar_prefetch = 0 : i64, scratch_operands = 1 : i64, tpu.core_type = #tpu.core_type<tc>, window_params = [{transform_indices = @transform_0, window_bounds = array<i64: 8, 128>}, {transform_indices = @transform_1, window_bounds = array<i64: 128, 128>}, {transform_indices = @transform_2, window_bounds = array<i64: 1, 128>}, {transform_indices = @transform_3, window_bounds = array<i64: 128, 128>}, {pipeline_mode = #tpu.pipeline_mode<synchronous>, transform_indices = @transform_4, window_bounds = array<i64: 1, 128>}, {transform_indices = @transform_5, window_bounds = array<i64: 8, 128>}]} {
    %c0 = arith.constant 0 : index
    %c0_0 = arith.constant 0 : index
    %0 = vector.load %arg2[%c0, %c0_0] : memref<8x128xf32, #tpu.memory_space<vmem>>, vector<8x128xf32>
    %c0_1 = arith.constant 0 : index
    %c0_2 = arith.constant 0 : index
    %1 = vector.load %arg3[%c0_1, %c0_2] : memref<128x128xf32, #tpu.memory_space<vmem>>, vector<128x128xf32>
    %cst = arith.constant dense<0.000000e+00> : vector<8x128xf32>
    %2 = tpu.matmul %0, %1, %cst {dimension_numbers = #tpu.dot_dimension_numbers<[1], [0], [0], [1], [0, 0, 1, 1], [], []>} : vector<8x128xf32>, vector<128x128xf32>, vector<8x128xf32> -> vector<8x128xf32>
    %c0_3 = arith.constant 0 : index
    %c0_4 = arith.constant 0 : index
    %3 = vector.load %arg4[%c0_3, %c0_4] : memref<1x128xf32, #tpu.memory_space<vmem>>, vector<1x128xf32>
    %4 = vector.broadcast %3 : vector<1x128xf32> to vector<8x128xf32>
    %5 = arith.addf %2, %4 : vector<8x128xf32>
    %cst_5 = arith.constant 0.000000e+00 : f32
    %6 = vector.broadcast %cst_5 : f32 to vector<8x128xf32>
    %7 = arith.maximumf %5, %6 : vector<8x128xf32>
    %c0_6 = arith.constant 0 : index
    %c0_7 = arith.constant 0 : index
    %8 = vector.load %arg5[%c0_6, %c0_7] : memref<128x128xf32, #tpu.memory_space<vmem>>, vector<128x128xf32>
    %cst_8 = arith.constant dense<0.000000e+00> : vector<8x128xf32>
    %9 = tpu.matmul %7, %8, %cst_8 {dimension_numbers = #tpu.dot_dimension_numbers<[1], [0], [0], [1], [0, 0, 1, 1], [], []>} : vector<8x128xf32>, vector<128x128xf32>, vector<8x128xf32> -> vector<8x128xf32>
    %c0_i32 = arith.constant 0 : i32
    %10 = arith.cmpi eq, %arg1, %c0_i32 : i32
    %11 = arith.extui %10 : i1 to i32
    %c0_i32_9 = arith.constant 0 : i32
    %12 = arith.cmpi ne, %11, %c0_i32_9 : i32
    scf.if %12 {
      %c0_13 = arith.constant 0 : index
      %c0_14 = arith.constant 0 : index
      %19 = vector.load %arg8[%c0_13, %c0_14] : memref<8x128xf32, #tpu.memory_space<vmem>>, vector<8x128xf32>
      tpu.vector_store %arg8[%c0_13, %c0_14], %9 {strides = array<i32>} : memref<8x128xf32, #tpu.memory_space<vmem>>, vector<8x128xf32>,
    } else {
    }
    %c0_i32_10 = arith.constant 0 : i32
    %13 = arith.cmpi sgt, %arg1, %c0_i32_10 : i32
    %14 = arith.extui %13 : i1 to i32
    %c0_i32_11 = arith.constant 0 : i32
    %15 = arith.cmpi ne, %14, %c0_i32_11 : i32
    scf.if %15 {
      %c0_13 = arith.constant 0 : index
      %c0_14 = arith.constant 0 : index
      %19 = vector.load %arg8[%c0_13, %c0_14] : memref<8x128xf32, #tpu.memory_space<vmem>>, vector<8x128xf32>
      %20 = arith.addf %19, %9 : vector<8x128xf32>
      %c0_15 = arith.constant 0 : index
      %c0_16 = arith.constant 0 : index
      %21 = vector.load %arg8[%c0_15, %c0_16] : memref<8x128xf32, #tpu.memory_space<vmem>>, vector<8x128xf32>
      tpu.vector_store %arg8[%c0_15, %c0_16], %20 {strides = array<i32>} : memref<8x128xf32, #tpu.memory_space<vmem>>, vector<8x128xf32>,
    } else {
    }
    %c3_i32 = arith.constant 3 : i32
    %16 = arith.cmpi eq, %arg1, %c3_i32 : i32
    %17 = arith.extui %16 : i1 to i32
    %c0_i32_12 = arith.constant 0 : i32
    %18 = arith.cmpi ne, %17, %c0_i32_12 : i32
    scf.if %18 {
      %c0_13 = arith.constant 0 : index
      %c0_14 = arith.constant 0 : index
      %19 = vector.load %arg8[%c0_13, %c0_14] : memref<8x128xf32, #tpu.memory_space<vmem>>, vector<8x128xf32>
      %c0_15 = arith.constant 0 : index
      %c0_16 = arith.constant 0 : index
      %20 = vector.load %arg6[%c0_15, %c0_16] : memref<1x128xf32, #tpu.memory_space<vmem>>, vector<1x128xf32>
      %21 = vector.broadcast %20 : vector<1x128xf32> to vector<8x128xf32>
      %22 = arith.addf %19, %21 : vector<8x128xf32>
      %c0_17 = arith.constant 0 : index
      %c0_18 = arith.constant 0 : index
      %23 = vector.load %arg7[%c0_17, %c0_18] : memref<8x128xf32, #tpu.memory_space<vmem>>, vector<8x128xf32>
      tpu.vector_store %arg7[%c0_17, %c0_18], %22 {strides = array<i32>} : memref<8x128xf32, #tpu.memory_space<vmem>>, vector<8x128xf32>,
    } else {
    }
    return
  }
  func.func @transform_0(%arg0: i32, %arg1: i32) -> (i32, i32) {
    %c0_i32 = arith.constant 0 : i32
    %c0_i32_0 = arith.constant 0 : i32
    return %arg0, %c0_i32 : i32, i32
  }
  func.func @transform_1(%arg0: i32, %arg1: i32) -> (i32, i32) {
    %c0_i32 = arith.constant 0 : i32
    %c0_i32_0 = arith.constant 0 : i32
    return %c0_i32, %arg1 : i32, i32
  }
  func.func @transform_2(%arg0: i32, %arg1: i32) -> (i32, i32) {
    %c0_i32 = arith.constant 0 : i32
    %c0_i32_0 = arith.constant 0 : i32
    return %c0_i32, %arg1 : i32, i32
  }
  func.func @transform_3(%arg0: i32, %arg1: i32) -> (i32, i32) {
    %c0_i32 = arith.constant 0 : i32
    %c0_i32_0 = arith.constant 0 : i32
    return %arg1, %c0_i32 : i32, i32
  }
  func.func @transform_4(%arg0: i32, %arg1: i32) -> (i32, i32) {
    %c0_i32 = arith.constant 0 : i32
    %c0_i32_0 = arith.constant 0 : i32
    %c0_i32_1 = arith.constant 0 : i32
    return %c0_i32, %c0_i32_0 : i32, i32
  }
  func.func @transform_5(%arg0: i32, %arg1: i32) -> (i32, i32) {
    %c0_i32 = arith.constant 0 : i32
    %c0_i32_0 = arith.constant 0 : i32
    return %arg0, %c0_i32 : i32, i32
  }
}

</mosaic_0001>

<llo_original>
// kernel: tpu_custom_call.1
$region0: #{tpu_custom_call.1}
  #allocation0 [shape = 'u32[]', space=smem, size = 0x4, offset = 0x4, fixed_abs, tag = 'smem constant byte address 0x4 - core index']
  #allocation1 [shape = 'u32[72,128]{1,0:T(1,128)}', space=vmem, size = 0x9000, scoped, tag = 'internal scratch']
  #allocation2 [shape = 'f32[8,128]{1,0:T(8,128)}', space=vmem, size = 0x1000, scoped, tag = 'scratch operand']
  %s0 = inlined_call_operand.hbm [shape: f32[16,128], index: 0, kind: input, shape index: {}]
  %s1 = inlined_call_operand.hbm [shape: f32[128,512], index: 1, kind: input, shape index: {}]
  %s2 = inlined_call_operand.hbm [shape: f32[1,512], index: 2, kind: input, shape index: {}]
  %s3 = inlined_call_operand.hbm [shape: f32[512,128], index: 3, kind: input, shape index: {}]
  %s4 = inlined_call_operand.vmem [shape: f32[1,128], index: 4, kind: input, shape index: {}]
  %s5 = inlined_call_operand.hbm [shape: f32[16,128], index: 5, kind: output, shape index: {}]
  %s6 = sld [smem:[#allocation0]]
  $region81: #{tpu_custom_call.1} parent=0
    _
  %s8 = ssub.s32 1, %s6
  %s9 = scalar_select 0, %s8, %s6
  $region1: #{tpu_custom_call.1} parent=0
    #allocation3 [shape = 'u8[8192]{0}', space=vmem, size = 0x2000, scoped, tag = 'input window, operand 0']
    #allocation4 [shape = 's32[2]{0}', space=sflag, size = 0x8, scoped, tag = 'scoped memory for tpu_custom_call.1']
    #allocation5 [shape = 's32[2]{0}', space=sflag, size = 0x8, scoped, tag = 'scoped memory for tpu_custom_call.1']
    #allocation6 [shape = 'u8[131072]{0}', space=vmem, size = 0x20000, scoped, tag = 'input window, operand 1']
    #allocation7 [shape = 's32[2]{0}', space=sflag, size = 0x8, scoped, tag = 'scoped memory for tpu_custom_call.1']
    #allocation8 [shape = 'u8[1024]{0}', space=vmem, size = 0x400, scoped, tag = 'input window, operand 2']
    #allocation9 [shape = 'u8[131072]{0}', space=vmem, size = 0x20000, scoped, tag = 'input window, operand 3']
    #allocation10 [shape = 's32[2]{0}', space=sflag, size = 0x8, scoped, tag = 'scoped memory for tpu_custom_call.1']
    #allocation11 [shape = 'u8[8192]{0}', space=vmem, size = 0x2000, scoped, tag = 'output window, operand 0']
    %10 = vsyncpa [#allocation4], 0
    %s11 = scalar_lea.sflag [#allocation4], 1
    %12 = vsyncpa %s11, 0
    %13 = vsyncpa [#allocation7], 0
    %s14 = scalar_lea.sflag [#allocation7], 1
    %15 = vsyncpa %s14, 0
    %16 = vsyncpa [#allocation10], 0
    %s17 = scalar_lea.sflag [#allocation10], 1
    %18 = vsyncpa %s17, 0
    %19 = vsyncpa [#allocation5], 0
    %s20 = scalar_lea.sflag [#allocation5], 1
    %21 = vsyncpa %s20, 0
    loop: start=0, step=1, limit=10
    $region2: #{tpu_custom_call.1} parent=1 // loop_pre_header
      _
    $region3: #{tpu_custom_call.1} parent=1 // loop_header
      %s23 = sphi 0, %s27
      %p24 = scmp.ge.s32.totalorder %s23, 10
      %s30 = sphi 0, %s42
      %s31 = sphi 0, %s38
      %s32 = sphi 0, %s30
      %s33 = sphi 0, %s31
      %s34 = sphi 0, %s32
      %s35 = sphi 0, %s33
      %s45 = sphi 0, %s47
      %s48 = sphi 0, %s45
      %s49 = sphi 0, %s48
      %s65 = sphi 0, %s49
      %s71 = sphi 0, %s73
      %s74 = sphi 0, %s71
      %s75 = sphi 0, %s74
      %s91 = sphi 0, %s75
      %s97 = sphi 0, %s99
      %s100 = sphi 0, %s97
      %s101 = sphi 0, %s100
      %s117 = sphi 0, %s101
      %s123 = sphi 0, %s125
      %s126 = sphi 0, %s123
      %s127 = sphi 0, %s126
      %s143 = sphi 0, %s127
      %s147 = sphi 0, %s147
      %s149 = sphi 0, %s147
      %s150 = sphi 0, %s149
      %s164 = sphi 0, %s150
      %s170 = sphi 0, %s172
      %s173 = sphi 0, %s170
      %s174 = sphi 0, %s173
      %s190 = sphi 0, %s174
    $region4: #{tpu_custom_call.1} parent=1 // loop_header_branch
      %26 = sbr.rel (%p24) target = $region8
    $region5: #{tpu_custom_call.1} parent=1 // loop_body
      %s28 = ssub.s32 %s23, 1
      %s29 = ssub.s32 %s23, 2
      %s36 = sadd.s32 1, %s31
      %p37 = scmp.ge.s32.totalorder %s36, 4
      %s38 = scalar_select %p37, 0, %s36
      %s39 = sadd.s32 1, %s30
      %s40 = scalar_select %p37, %s39, %s30
      %p41 = scmp.ge.s32.totalorder %s40, 2
      %s42 = scalar_select %p41, 0, %s40
      %s43 = ssub.s32 %s30, %s42
      %p44 = scmp.eq.s32.totalorder %s43, 0
      %s46 = sadd.s32 %s45, 1
      %s47 = scalar_select %p44, %s45, %s46
      %p50 = pneg %p44
      %p51 = scmp.eq.s32.totalorder %s23, 7
      %p52 = por %p50, %p51
      %p53 = scmp.ne.s32.totalorder %s45, %s48
      %p54 = scmp.eq.s32.totalorder %s23, 0
      %p55 = por %p53, %p54
      %p56 = scmp.ne.s32.totalorder %s45, %s48
      %p57 = scmp.eq.s32.totalorder %s28, 7
      %p58 = por %p56, %p57
      %p59 = scmp.ne.s32.totalorder %s48, %s49
      %p60 = scmp.eq.s32.totalorder %s28, 0
      %p61 = por %p59, %p60
      %p62 = scmp.ne.s32.totalorder %s48, %s49
      %p63 = scmp.eq.s32.totalorder %s29, 7
      %p64 = por %p62, %p63
      %p66 = scmp.ne.s32.totalorder %s49, %s65
      %p67 = scmp.eq.s32.totalorder %s29, 0
      %p68 = por %p66, %p67
      %s69 = ssub.s32 %s31, %s38
      %p70 = scmp.eq.s32.totalorder %s69, 0
      %s72 = sadd.s32 %s71, 1
      %s73 = scalar_select %p70, %s71, %s72
      %p76 = pneg %p70
      %p77 = scmp.eq.s32.totalorder %s23, 7
      %p78 = por %p76, %p77
      %p79 = scmp.ne.s32.totalorder %s71, %s74
      %p80 = scmp.eq.s32.totalorder %s23, 0
      %p81 = por %p79, %p80
      %p82 = scmp.ne.s32.totalorder %s71, %s74
      %p83 = scmp.eq.s32.totalorder %s28, 7
      %p84 = por %p82, %p83
      %p85 = scmp.ne.s32.totalorder %s74, %s75
      %p86 = scmp.eq.s32.totalorder %s28, 0
      %p87 = por %p85, %p86
      %p88 = scmp.ne.s32.totalorder %s74, %s75
      %p89 = scmp.eq.s32.totalorder %s29, 7
      %p90 = por %p88, %p89
      %p92 = scmp.ne.s32.totalorder %s75, %s91
      %p93 = scmp.eq.s32.totalorder %s29, 0
      %p94 = por %p92, %p93
      %s95 = ssub.s32 %s31, %s38
      %p96 = scmp.eq.s32.totalorder %s95, 0
      %s98 = sadd.s32 %s97, 1
      %s99 = scalar_select %p96, %s97, %s98
      %p102 = pneg %p96
      %p103 = scmp.eq.s32.totalorder %s23, 7
      %p104 = por %p102, %p103
      %p105 = scmp.ne.s32.totalorder %s97, %s100
      %p106 = scmp.eq.s32.totalorder %s23, 0
      %p107 = por %p105, %p106
      %p108 = scmp.ne.s32.totalorder %s97, %s100
      %p109 = scmp.eq.s32.totalorder %s28, 7
      %p110 = por %p108, %p109
      %p111 = scmp.ne.s32.totalorder %s100, %s101
      %p112 = scmp.eq.s32.totalorder %s28, 0
      %p113 = por %p111, %p112
      %p114 = scmp.ne.s32.totalorder %s100, %s101
      %p115 = scmp.eq.s32.totalorder %s29, 7
      %p116 = por %p114, %p115
      %p118 = scmp.ne.s32.totalorder %s101, %s117
      %p119 = scmp.eq.s32.totalorder %s29, 0
      %p120 = por %p118, %p119
      %s121 = ssub.s32 %s31, %s38
      %p122 = scmp.eq.s32.totalorder %s121, 0
      %s124 = sadd.s32 %s123, 1
      %s125 = scalar_select %p122, %s123, %s124
      %p128 = pneg %p122
      %p129 = scmp.eq.s32.totalorder %s23, 7
      %p130 = por %p128, %p129
      %p131 = scmp.ne.s32.totalorder %s123, %s126
      %p132 = scmp.eq.s32.totalorder %s23, 0
      %p133 = por %p131, %p132
      %p134 = scmp.ne.s32.totalorder %s123, %s126
      %p135 = scmp.eq.s32.totalorder %s28, 7
      %p136 = por %p134, %p135
      %p137 = scmp.ne.s32.totalorder %s126, %s127
      %p138 = scmp.eq.s32.totalorder %s28, 0
      %p139 = por %p137, %p138
      %p140 = scmp.ne.s32.totalorder %s126, %s127
      %p141 = scmp.eq.s32.totalorder %s29, 7
      %p142 = por %p140, %p141
      %p144 = scmp.ne.s32.totalorder %s127, %s143
      %p145 = scmp.eq.s32.totalorder %s29, 0
      %p146 = por %p144, %p145
      %s148 = sadd.s32 %s147, 1
      %p151 = scmp.eq.s32.totalorder %s23, 7
      %p152 = scmp.ne.s32.totalorder %s147, %s149
      %p153 = scmp.eq.s32.totalorder %s23, 0
      %p154 = por %p152, %p153
      %p155 = scmp.ne.s32.totalorder %s147, %s149
      %p156 = scmp.eq.s32.totalorder %s28, 7
      %p157 = por %p155, %p156
      %p158 = scmp.ne.s32.totalorder %s149, %s150
      %p159 = scmp.eq.s32.totalorder %s28, 0
      %p160 = por %p158, %p159
      %p161 = scmp.ne.s32.totalorder %s149, %s150
      %p162 = scmp.eq.s32.totalorder %s29, 7
      %p163 = por %p161, %p162
      %p165 = scmp.ne.s32.totalorder %s150, %s164
      %p166 = scmp.eq.s32.totalorder %s29, 0
      %p167 = por %p165, %p166
      %s168 = ssub.s32 %s30, %s42
      %p169 = scmp.eq.s32.totalorder %s168, 0
      %s171 = sadd.s32 %s170, 1
      %s172 = scalar_select %p169, %s170, %s171
      %p175 = pneg %p169
      %p176 = scmp.eq.s32.totalorder %s23, 7
      %p177 = por %p175, %p176
      %p178 = scmp.ne.s32.totalorder %s170, %s173
      %p179 = scmp.eq.s32.totalorder %s23, 0
      %p180 = por %p178, %p179
      %p181 = scmp.ne.s32.totalorder %s170, %s173
      %p182 = scmp.eq.s32.totalorder %s28, 7
      %p183 = por %p181, %p182
      %p184 = scmp.ne.s32.totalorder %s173, %s174
      %p185 = scmp.eq.s32.totalorder %s28, 0
      %p186 = por %p184, %p185
      %p187 = scmp.ne.s32.totalorder %s173, %s174
      %p188 = scmp.eq.s32.totalorder %s29, 7
      %p189 = por %p187, %p188
      %p191 = scmp.ne.s32.totalorder %s174, %s190
      %p192 = scmp.eq.s32.totalorder %s29, 0
      %p193 = por %p191, %p192
      %p194 = scmp.le.s32.totalorder 1, %s23
      %p195 = scmp.lt.s32.totalorder %s23, 9
      %p196 = pnand %p194, %p195
      %p197 = pneg %p196
      // Predicated region
      $region9: #{tpu_custom_call.1} parent=5 // pred_check
        _
      $region10: #{tpu_custom_call.1} parent=5 // pred_check_branch
        %199 = sbr.rel (%p196) target = $region12
      $region11: #{tpu_custom_call.1} parent=5 // pred_region
        %s200 = ssub.s32 %s23, 1
        // Predicated region
        $region13: #{tpu_custom_call.1} parent=11 // pred_check
          %p201 = pneg %p160
        $region14: #{tpu_custom_call.1} parent=11 // pred_check_branch
          %203 = sbr.rel (%p201) target = $region16
        $region15: #{tpu_custom_call.1} parent=11 // pred_region
          _
        $region16: #{tpu_custom_call.1} parent=11 // pred_fallthru
          _
      $region12: #{tpu_custom_call.1} parent=5 // pred_fallthru
        _
      %p204 = scmp.lt.s32.totalorder %s23, 8
      // Predicated region
      $region17: #{tpu_custom_call.1} parent=5 // pred_check
        %p205 = pneg %p204
      $region18: #{tpu_custom_call.1} parent=5 // pred_check_branch
        %207 = sbr.rel (%p205) target = $region20
      $region19: #{tpu_custom_call.1} parent=5 // pred_region
        // Predicated region
        $region21: #{tpu_custom_call.1} parent=19 // pred_check
          %p208 = pneg %p55
        $region22: #{tpu_custom_call.1} parent=19 // pred_check_branch
          %210 = sbr.rel (%p208) target = $region24
        $region23: #{tpu_custom_call.1} parent=19 // pred_region
          %s211 = sand.u32 %s45, 1
          %s212 = scalar_lea.sflag [#allocation4], %s211
          %s213 = sand.u32 %s45, 1
          %s214 = smul.addr %s213, 8
          %s215 = scalar_lea.vmem [#allocation3], %s214
          %217 = vsyncadd %s212, 0
          %s218 = smul.addr %s30, 8
          %s219 = scalar_lea.hbm %s0, %s218
          %s221 = sshll.u32 %s219, 4
          %s222 = int_to_ptr.hbm [resolvable:$true] %s221
          %s223 = sshll.u32 %s215, 4
          %s224 = int_to_ptr.vmem [resolvable:$true] %s223
          %226 = dma.hbm_to_vmem [thread:$0]  %s222, 128, %s224, %s212
        $region24: #{tpu_custom_call.1} parent=19 // pred_fallthru
          _
        // Predicated region
        $region25: #{tpu_custom_call.1} parent=19 // pred_check
          %p227 = pneg %p81
        $region26: #{tpu_custom_call.1} parent=19 // pred_check_branch
          %229 = sbr.rel (%p227) target = $region28
        $region27: #{tpu_custom_call.1} parent=19 // pred_region
          %s230 = sand.u32 %s23, 1
          %s231 = scalar_lea.sflag [#allocation7], %s230
          %s232 = sand.u32 %s71, 1
          %s233 = smul.addr %s232, 128
          %s234 = scalar_lea.vmem [#allocation6], %s233
          %236 = vsyncadd %s231, 0
          %s237 = smul.addr %s31, 8
          %s238 = scalar_lea.hbm %s1, %s237
          %s239 = sshll.u32 %s238, 4
          %s240 = int_to_ptr.hbm [resolvable:$true] %s239
          %s241 = sshll.u32 %s234, 4
          %s242 = int_to_ptr.vmem [resolvable:$true] %s241
          %247 = dma.hbm_to_vmem [thread:$0]  %s240, 2048, %s242, %s231, 512, 128, 8
        $region28: #{tpu_custom_call.1} parent=19 // pred_fallthru
          _
        // Predicated region
        $region29: #{tpu_custom_call.1} parent=19 // pred_check
          %p248 = pneg %p107
        $region30: #{tpu_custom_call.1} parent=19 // pred_check_branch
          %250 = sbr.rel (%p248) target = $region32
        $region31: #{tpu_custom_call.1} parent=19 // pred_region
          %s251 = sand.u32 %s23, 1
          %s252 = scalar_lea.sflag [#allocation7], %s251
          %s253 = sand.u32 %s97, 1
          %s254 = scalar_lea.vmem [#allocation8], %s253
          %256 = vsyncadd %s252, 0
          %s257 = scalar_lea.hbm %s2, %s31
          %s259 = sshll.u32 %s257, 4
          %s260 = int_to_ptr.hbm [resolvable:$true] %s259
          %s261 = sshll.u32 %s254, 4
          %s262 = int_to_ptr.vmem [resolvable:$true] %s261
          %264 = dma.hbm_to_vmem [thread:$0]  %s260, 16, %s262, %s252
        $region32: #{tpu_custom_call.1} parent=19 // pred_fallthru
          _
        // Predicated region
        $region33: #{tpu_custom_call.1} parent=19 // pred_check
          %p265 = pneg %p133
        $region34: #{tpu_custom_call.1} parent=19 // pred_check_branch
          %267 = sbr.rel (%p265) target = $region36
        $region35: #{tpu_custom_call.1} parent=19 // pred_region
          %s268 = sand.u32 %s123, 1
          %s269 = scalar_lea.sflag [#allocation10], %s268
          %s270 = sand.u32 %s123, 1
          %s271 = smul.addr %s270, 128
          %s272 = scalar_lea.vmem [#allocation9], %s271
          %s273 = smul.u32 16, %s31
          %275 = vsyncadd %s269, 0
          %s276 = smul.addr %s273, 8
          %s277 = scalar_lea.hbm %s3, %s276
          %s278 = sshll.u32 %s277, 4
          %s279 = int_to_ptr.hbm [resolvable:$true] %s278
          %s280 = sshll.u32 %s272, 4
          %s281 = int_to_ptr.vmem [resolvable:$true] %s280
          %286 = dma.hbm_to_vmem [thread:$0]  %s279, 2048, %s281, %s269, 128, 128, 8
        $region36: #{tpu_custom_call.1} parent=19 // pred_fallthru
          _
      $region20: #{tpu_custom_call.1} parent=5 // pred_fallthru
        _
      %p287 = scmp.le.s32.totalorder 1, %s23
      %p288 = scmp.lt.s32.totalorder %s23, 9
      %p289 = pnand %p287, %p288
      %p290 = pneg %p289
      // Predicated region
      $region37: #{tpu_custom_call.1} parent=5 // pred_check
        _
      $region38: #{tpu_custom_call.1} parent=5 // pred_check_branch
        %292 = sbr.rel (%p289) target = $region40
      $region39: #{tpu_custom_call.1} parent=5 // pred_region
        %s293 = ssub.s32 %s23, 1
        %s294 = sand.u32 %s48, 1
        %s295 = scalar_lea.sflag [#allocation4], %s294
        %s296 = sand.u32 %s48, 1
        %s297 = smul.addr %s296, 8
        %s298 = scalar_lea.vmem [#allocation3], %s297
        // Predicated region
        $region41: #{tpu_custom_call.1} parent=39 // pred_check
          %p299 = pneg %p61
        $region42: #{tpu_custom_call.1} parent=39 // pred_check_branch
          %301 = sbr.rel (%p299) target = $region44
        $region43: #{tpu_custom_call.1} parent=39 // pred_region
          %303 = dma.done %s295, 128
        $region44: #{tpu_custom_call.1} parent=39 // pred_fallthru
          _
        %s304 = sand.u32 %s28, 1
        %s305 = scalar_lea.sflag [#allocation7], %s304
        %s306 = sand.u32 %s74, 1
        %s307 = smul.addr %s306, 128
        %s308 = scalar_lea.vmem [#allocation6], %s307
        // Predicated region
        $region45: #{tpu_custom_call.1} parent=39 // pred_check
          %p309 = pneg %p87
        $region46: #{tpu_custom_call.1} parent=39 // pred_check_branch
          %311 = sbr.rel (%p309) target = $region48
        $region47: #{tpu_custom_call.1} parent=39 // pred_region
          %313 = dma.done %s305, 2048
        $region48: #{tpu_custom_call.1} parent=39 // pred_fallthru
          _
        %s314 = sand.u32 %s28, 1
        %s315 = scalar_lea.sflag [#allocation7], %s314
        %s316 = sand.u32 %s100, 1
        %s317 = scalar_lea.vmem [#allocation8], %s316
        // Predicated region
        $region49: #{tpu_custom_call.1} parent=39 // pred_check
          %p318 = pneg %p113
        $region50: #{tpu_custom_call.1} parent=39 // pred_check_branch
          %320 = sbr.rel (%p318) target = $region52
        $region51: #{tpu_custom_call.1} parent=39 // pred_region
          %322 = dma.done %s315, 16
        $region52: #{tpu_custom_call.1} parent=39 // pred_fallthru
          _
        %s323 = sand.u32 %s126, 1
        %s324 = scalar_lea.sflag [#allocation10], %s323
        %s325 = sand.u32 %s126, 1
        %s326 = smul.addr %s325, 128
        %s327 = scalar_lea.vmem [#allocation9], %s326
        // Predicated region
        $region53: #{tpu_custom_call.1} parent=39 // pred_check
          %p328 = pneg %p139
        $region54: #{tpu_custom_call.1} parent=39 // pred_check_branch
          %330 = sbr.rel (%p328) target = $region56
        $region55: #{tpu_custom_call.1} parent=39 // pred_region
          %332 = dma.done %s324, 2048
        $region56: #{tpu_custom_call.1} parent=39 // pred_fallthru
          _
        %s333 = sand.u32 %s48, 1
        %s334 = scalar_lea.sflag [#allocation4], %s333
        %s335 = sand.u32 %s48, 1
        %s336 = smul.addr %s335, 8
        %s337 = scalar_lea.vmem [#allocation3], %s336
        %p338 = pneg %p61
        %p339 = pneg %p58
        %s340 = sand.u32 %s28, 1
        %s341 = scalar_lea.sflag [#allocation7], %s340
        %s342 = sand.u32 %s74, 1
        %s343 = smul.addr %s342, 128
        %s344 = scalar_lea.vmem [#allocation6], %s343
        %p345 = pneg %p87
        %p346 = pneg %p84
        %s347 = sand.u32 %s28, 1
        %s348 = scalar_lea.sflag [#allocation7], %s347
        %s349 = sand.u32 %s100, 1
        %s350 = scalar_lea.vmem [#allocation8], %s349
        %p351 = pneg %p113
        %p352 = pneg %p110
        %s353 = sand.u32 %s126, 1
        %s354 = scalar_lea.sflag [#allocation10], %s353
        %s355 = sand.u32 %s126, 1
        %s356 = smul.addr %s355, 128
        %s357 = scalar_lea.vmem [#allocation9], %s356
        %p358 = pneg %p139
        %p359 = pneg %p136
        %p360 = pneg %p160
        %p361 = pneg %p157
        %p362 = pneg %p186
        %p363 = pneg %p183
        %s364 = sand.u32 %s173, 1
        %s365 = scalar_lea.sflag [#allocation5], %s364
        %s366 = sand.u32 %s173, 1
        %s367 = smul.addr %s366, 8
        %s368 = scalar_lea.vmem [#allocation11], %s367
        %s369 = smul.u32 16, %s33
        %v370 = vld [vmem:[%s298] sm:$0xff]
        %v371 = vld [vmem:[%s308] sm:$0xff]
        %v372 = vld [vmem:[%s308 + $0x8] sm:$0xff]
        %v373 = vld [vmem:[%s308 + $0x10] sm:$0xff]
        %v374 = vld [vmem:[%s308 + $0x18] sm:$0xff]
        %v375 = vld [vmem:[%s308 + $0x20] sm:$0xff]
        %v376 = vld [vmem:[%s308 + $0x28] sm:$0xff]
        %v377 = vld [vmem:[%s308 + $0x30] sm:$0xff]
        %v378 = vld [vmem:[%s308 + $0x38] sm:$0xff]
        %v379 = vld [vmem:[%s308 + $0x40] sm:$0xff]
        %v380 = vld [vmem:[%s308 + $0x48] sm:$0xff]
        %v381 = vld [vmem:[%s308 + $0x50] sm:$0xff]
        %v382 = vld [vmem:[%s308 + $0x58] sm:$0xff]
        %v383 = vld [vmem:[%s308 + $0x60] sm:$0xff]
        %v384 = vld [vmem:[%s308 + $0x68] sm:$0xff]
        %v385 = vld [vmem:[%s308 + $0x70] sm:$0xff]
        %v386 = vld [vmem:[%s308 + $0x78] sm:$0xff]
        %v387 = vld [vmem:[%s317] sm:$0x1]
        %v389 = vperm.slane %v387, 0
        %391 = vmatpush.msra.mxu0 %v386
        %392 = vmatpush.msra.mxu0 %v385
        %393 = vmatpush.msra.mxu0 %v384
        %394 = vmatpush.msra.mxu0 %v383
        %395 = vmatpush.msra.mxu0 %v382
        %396 = vmatpush.msra.mxu0 %v381
        %397 = vmatpush.msra.mxu0 %v380
        %398 = vmatpush.msra.mxu0 %v379
        %399 = vmatpush.msra.mxu0 %v378
        %400 = vmatpush.msra.mxu0 %v377
        %401 = vmatpush.msra.mxu0 %v376
        %402 = vmatpush.msra.mxu0 %v375
        %403 = vmatpush.msra.mxu0 %v374
        %404 = vmatpush.msra.mxu0 %v373
        %405 = vmatpush.msra.mxu0 %v372
        %406 = vmatpush.msra.mxu0 %v371
        %407 = vmatmul.f32.gmra.mxu0 %v370
        %v408 = vpop.f32.mrf.mxu0
        %v409 = vadd.f32 %v389, %v408
        %410 = vdwg.mxu0
        %v411 = vmax.f32 %v409, 0.0
        %v412 = vld [vmem:[%s327] sm:$0xff]
        %v413 = vld [vmem:[%s327 + $0x8] sm:$0xff]
        %v414 = vld [vmem:[%s327 + $0x10] sm:$0xff]
        %v415 = vld [vmem:[%s327 + $0x18] sm:$0xff]
        %v416 = vld [vmem:[%s327 + $0x20] sm:$0xff]
        %v417 = vld [vmem:[%s327 + $0x28] sm:$0xff]
        %v418 = vld [vmem:[%s327 + $0x30] sm:$0xff]
        %v419 = vld [vmem:[%s327 + $0x38] sm:$0xff]
        %v420 = vld [vmem:[%s327 + $0x40] sm:$0xff]
        %v421 = vld [vmem:[%s327 + $0x48] sm:$0xff]
        %v422 = vld [vmem:[%s327 + $0x50] sm:$0xff]
        %v423 = vld [vmem:[%s327 + $0x58] sm:$0xff]
        %v424 = vld [vmem:[%s327 + $0x60] sm:$0xff]
        %v425 = vld [vmem:[%s327 + $0x68] sm:$0xff]
        %v426 = vld [vmem:[%s327 + $0x70] sm:$0xff]
        %v427 = vld [vmem:[%s327 + $0x78] sm:$0xff]
        %428 = vmatpush.msra.mxu0 %v427
        %429 = vmatpush.msra.mxu0 %v426
        %430 = vmatpush.msra.mxu0 %v425
        %431 = vmatpush.msra.mxu0 %v424
        %432 = vmatpush.msra.mxu0 %v423
        %433 = vmatpush.msra.mxu0 %v422
        %434 = vmatpush.msra.mxu0 %v421
        %435 = vmatpush.msra.mxu0 %v420
        %436 = vmatpush.msra.mxu0 %v419
        %437 = vmatpush.msra.mxu0 %v418
        %438 = vmatpush.msra.mxu0 %v417
        %439 = vmatpush.msra.mxu0 %v416
        %440 = vmatpush.msra.mxu0 %v415
        %441 = vmatpush.msra.mxu0 %v414
        %442 = vmatpush.msra.mxu0 %v413
        %443 = vmatpush.msra.mxu0 %v412
        %444 = vmatmul.f32.gmra.mxu0 %v411
        %v445 = vpop.f32.mrf.mxu0
        %v446 = vadd.f32 0.0, %v445
        %447 = vdwg.mxu0
        %p448 = scmp.eq.s32.totalorder %s33, 0
        // Predicated region
        $region57: #{tpu_custom_call.1} parent=39 // pred_check
          %p449 = pneg %p448
        $region58: #{tpu_custom_call.1} parent=39 // pred_check_branch
          %451 = sbr.rel (%p449) target = $region60
        $region59: #{tpu_custom_call.1} parent=39 // pred_region
          %452 = vst [vmem:[#allocation2] sm:$0xff] %v446
        $region60: #{tpu_custom_call.1} parent=39 // pred_fallthru
          _
        %p453 = scmp.gt.s32.totalorder %s33, 0
        // Predicated region
        $region61: #{tpu_custom_call.1} parent=39 // pred_check
          %p454 = pneg %p453
        $region62: #{tpu_custom_call.1} parent=39 // pred_check_branch
          %456 = sbr.rel (%p454) target = $region64
        $region63: #{tpu_custom_call.1} parent=39 // pred_region
          %v457 = vld [vmem:[#allocation2] sm:$0xff]
          %v458 = vadd.f32 %v457, %v446
          %459 = vst [vmem:[#allocation2] sm:$0xff] %v458
        $region64: #{tpu_custom_call.1} parent=39 // pred_fallthru
          _
        %p460 = scmp.eq.s32.totalorder %s33, 3
        // Predicated region
        $region65: #{tpu_custom_call.1} parent=39 // pred_check
          %p461 = pneg %p460
        $region66: #{tpu_custom_call.1} parent=39 // pred_check_branch
          %463 = sbr.rel (%p461) target = $region68
        $region67: #{tpu_custom_call.1} parent=39 // pred_region
          %v464 = vld [vmem:[#allocation2] sm:$0xff]
          %v465 = vld [vmem:[%s4] sm:$0x1]
          %v467 = vperm.slane %v465, 0
          %v469 = vadd.f32 %v464, %v467
          %470 = vst [vmem:[%s368] sm:$0xff] %v469
        $region68: #{tpu_custom_call.1} parent=39 // pred_fallthru
          _
        %s471 = sand.u32 %s173, 1
        %s472 = scalar_lea.sflag [#allocation5], %s471
        %s473 = sand.u32 %s173, 1
        %s474 = smul.addr %s473, 8
        %s475 = scalar_lea.vmem [#allocation11], %s474
        // Predicated region
        $region69: #{tpu_custom_call.1} parent=39 // pred_check
          %p476 = pneg %p183
        $region70: #{tpu_custom_call.1} parent=39 // pred_check_branch
          %478 = sbr.rel (%p476) target = $region72
        $region71: #{tpu_custom_call.1} parent=39 // pred_region
          %480 = vsyncadd %s472, 0
          %s481 = smul.addr %s32, 8
          %s482 = scalar_lea.hbm %s5, %s481
          %s484 = sshll.u32 %s475, 4
          %s485 = int_to_ptr.vmem [resolvable:$true] %s484
          %s486 = sshll.u32 %s482, 4
          %s487 = int_to_ptr.hbm [resolvable:$true] %s486
          %489 = dma.vmem_to_hbm [thread:$0]  %s485, 128, %s487, %s472
        $region72: #{tpu_custom_call.1} parent=39 // pred_fallthru
          _
      $region40: #{tpu_custom_call.1} parent=5 // pred_fallthru
        _
      %p490 = scmp.le.s32.totalorder 2, %s23
      // Predicated region
      $region73: #{tpu_custom_call.1} parent=5 // pred_check
        %p491 = pneg %p490
      $region74: #{tpu_custom_call.1} parent=5 // pred_check_branch
        %493 = sbr.rel (%p491) target = $region76
      $region75: #{tpu_custom_call.1} parent=5 // pred_region
        %s494 = ssub.s32 %s23, 2
        // Predicated region
        $region77: #{tpu_custom_call.1} parent=75 // pred_check
          %p495 = pneg %p189
        $region78: #{tpu_custom_call.1} parent=75 // pred_check_branch
          %497 = sbr.rel (%p495) target = $region80
        $region79: #{tpu_custom_call.1} parent=75 // pred_region
          %s498 = sand.u32 %s174, 1
          %s499 = scalar_lea.sflag [#allocation5], %s498
          %s500 = sand.u32 %s174, 1
          %s501 = smul.addr %s500, 8
          %s502 = scalar_lea.vmem [#allocation11], %s501
          %504 = dma.done %s499, 128
        $region80: #{tpu_custom_call.1} parent=75 // pred_fallthru
          _
      $region76: #{tpu_custom_call.1} parent=5 // pred_fallthru
        _
    $region6: #{tpu_custom_call.1} parent=1 // loop_footer
      %s27 = sadd.s32 1, %s23
    $region7: #{tpu_custom_call.1} parent=1 // loop_footer_branch
      %22 = sbr.rel target = $region3
    $region8: #{tpu_custom_call.1} parent=1 // loop_exit
      _
    %505 = vsyncpa [#allocation4], 1
    %s506 = scalar_lea.sflag [#allocation4], 1
    %507 = vsyncpa %s506, 1
    %508 = vsyncpa [#allocation7], 1
    %s509 = scalar_lea.sflag [#allocation7], 1
    %510 = vsyncpa %s509, 1
    %511 = vsyncpa [#allocation10], 1
    %s512 = scalar_lea.sflag [#allocation10], 1
    %513 = vsyncpa %s512, 1
    %514 = vsyncpa [#allocation5], 1
    %s515 = scalar_lea.sflag [#allocation5], 1
    %516 = vsyncpa %s515, 1

</llo_original>
